<compile_context>
chip_gen: v5e
topology: v5e:2x2
jax: 0.10.0
libtpu: 0.0.40
codegen_flags: <defaults>
</compile_context>

<pallas_src>
import functools

import jax
import jax.numpy as jnp
from jax.experimental import pallas as pl
from jax.experimental.pallas import tpu as pltpu

_NEG_BIG = -1e30      # finite floor for the running max (no NaN on empty rows)
_FIRST = 1            # schedule flag: first tile of a row block (init accums)
_LAST = 2             # schedule flag: last tile of a row block (finalize)
_ACTIVE = 4           # schedule flag: real (non-padding) step (do compute)


def _round_up(x, mult):
    return ((x + mult - 1) // mult) * mult


def _row_lse(v):
    """Per-row logsumexp over the lane axis; -inf (not NaN) for empty rows."""
    m_row = jnp.maximum(jnp.max(v, axis=-1, keepdims=True), _NEG_BIG)
    return m_row + jnp.log(jnp.sum(jnp.exp(v - m_row), axis=-1, keepdims=True))


# --------------------------- small-batch fused path --------------------------
def _fused_circle_kernel(lab_sub_ref, lab_lane_ref, x_ref, pos_ref, neg_ref,
                         *, m, gamma, n_valid, n_pad):
    x = x_ref[...].astype(jnp.float32)
    ssq = jnp.sum(x * x, axis=-1, keepdims=True)
    xn = x * jax.lax.rsqrt(jnp.maximum(ssq, 1e-24))     # F.normalize, eps=1e-12
    sim = jax.lax.dot_general(xn, xn, (((1,), (1,)), ((), ())),
                              preferred_element_type=jnp.float32)   # (T, T)
    r_io = jax.lax.broadcasted_iota(jnp.int32, (n_pad, n_pad), 0)
    c_io = jax.lax.broadcasted_iota(jnp.int32, (n_pad, n_pad), 1)
    valid = c_io > r_io                                  # strict upper triangle
    if n_valid != n_pad:                                 # trace-time branch
        valid = jnp.logical_and(valid, c_io < n_valid)
        valid = jnp.logical_and(valid, r_io < n_valid)
    same = lab_sub_ref[...] == lab_lane_ref[...]         # (T,1)==(1,T)->(T,T)
    neg_inf = jnp.float32(-jnp.inf)
    logit_p = jnp.where(
        jnp.logical_and(valid, same),
        -jnp.maximum(1.0 + m - sim, 0.0) * (sim - (1.0 - m)) * gamma, neg_inf)
    logit_n = jnp.where(
        jnp.logical_and(valid, jnp.logical_not(same)),
        jnp.maximum(sim + m, 0.0) * (sim - m) * gamma, neg_inf)
    pos_ref[...] = _row_lse(logit_p)
    neg_ref[...] = _row_lse(logit_n)


# ------------------------------- tiled path ----------------------------------
def _l2_normalize_kernel(x_ref, o_ref):
    x = x_ref[...].astype(jnp.float32)
    ssq = jnp.sum(x * x, axis=-1, keepdims=True)
    o_ref[...] = x * jax.lax.rsqrt(jnp.maximum(ssq, 1e-24))


def _pair_lse_kernel(row_ref, col_ref, flg_ref,
                     labr_ref, labc_ref, xr_ref, xct_ref,
                     pos_ref, neg_ref,
                     mp_ref, sp_ref, mn_ref, sn_ref,
                     *, m, gamma, tile, n_valid, n_pad, steps_per_group):
    g = pl.program_id(0)                 # group ("parallel": v7x megacore)
    l = pl.program_id(1)                 # step within group ("arbitrary")
    step = g * steps_per_group + l
    flags = flg_ref[step]
    i = row_ref[step]                    # row block index (same as index_maps)
    j = col_ref[step]                    # col block index

    @pl.when((flags & _FIRST) != 0)
    def _init():
        mp_ref[...] = jnp.full((tile, 1), _NEG_BIG, jnp.float32)
        sp_ref[...] = jnp.zeros((tile, 1), jnp.float32)
        mn_ref[...] = jnp.full((tile, 1), _NEG_BIG, jnp.float32)
        sn_ref[...] = jnp.zeros((tile, 1), jnp.float32)

    @pl.when((flags & _ACTIVE) != 0)
    def _compute():
        # Natural MXU layout: (T, D) x (D, T); col operand is pre-transposed
        # once outside the kernel, so no per-tile transpose is needed here.
        sim = jnp.dot(xr_ref[...], xct_ref[...],
                      preferred_element_type=jnp.float32)            # (T, T)

        r_io = jax.lax.broadcasted_iota(jnp.int32, (tile, tile), 0)
        c_io = jax.lax.broadcasted_iota(jnp.int32, (tile, tile), 1)
        # global col > global row  <=>  (c - r) > (i - j) * tile
        valid = (c_io - r_io) > (i - j) * tile
        if n_valid != n_pad:             # trace-time: only if batch was padded
            valid = jnp.logical_and(valid, (j * tile + c_io) < n_valid)
            valid = jnp.logical_and(valid, (i * tile + r_io) < n_valid)
        same = labr_ref[...] == labc_ref[j]              # (T,1)==(1,T)->(T,T)

        neg_inf = jnp.float32(-jnp.inf)

        def online(mask, logit, m_acc, s_acc):
            v = jnp.where(mask, logit, neg_inf)
            t_max = jnp.max(v, axis=-1, keepdims=True)   # lane-axis reduce
            m_new = jnp.maximum(m_acc[...], t_max)       # stays finite
            alpha = jnp.exp(m_acc[...] - m_new)
            s_acc[...] = alpha * s_acc[...] + jnp.sum(
                jnp.exp(v - m_new), axis=-1, keepdims=True)
            m_acc[...] = m_new

        # positive branch fully reduced before the negative branch is built:
        # caps the number of simultaneously-live (T, T) temporaries.
        online(jnp.logical_and(valid, same),
               -jnp.maximum(1.0 + m - sim, 0.0) * (sim - (1.0 - m)) * gamma,
               mp_ref, sp_ref)
        online(jnp.logical_and(valid, jnp.logical_not(same)),
               jnp.maximum(sim + m, 0.0) * (sim - m) * gamma,
               mn_ref, sn_ref)

    @pl.when((flags & _LAST) != 0)
    def _finalize():
        # rows with no valid pairs: -1e30 + log(0) = -inf (no NaN).
        pos_ref[...] = mp_ref[...] + jnp.log(sp_ref[...])
        neg_ref[...] = mn_ref[...] + jnp.log(sn_ref[...])


def _triangle_schedule(R):
    """Upper-triangular tile schedule, row blocks i and R-1-i paired per group
    so every group has (almost) the same number of tiles (v7x load balance)."""
    groups = []
    for g in range((R + 1) // 2):
        rows = (g,) if (R - 1 - g) == g else (g, R - 1 - g)
        tiles = []
        for i in rows:
            for j in range(i, R):
                f = _ACTIVE
                if j == i:
                    f |= _FIRST
                if j == R - 1:
                    f |= _LAST
                tiles.append((i, j, f))
        groups.append(tiles)
    L = max(len(t) for t in groups)
    row_ids, col_ids, flags = [], [], []
    for tiles in groups:
        li, lj, _ = tiles[-1]
        # inactive padding steps repeat the last tile: no new DMAs, no compute.
        tiles = tiles + [(li, lj, 0)] * (L - len(tiles))
        for (i, j, f) in tiles:
            row_ids.append(i)
            col_ids.append(j)
            flags.append(f)
    return (jnp.asarray(row_ids, jnp.int32),
            jnp.asarray(col_ids, jnp.int32),
            jnp.asarray(flags, jnp.int32),
            len(groups), L)


def circle_loss(feat, label, *, m=0.25, gamma=256.0, block=None):
    """feat: (N, D) float, label: (N,) int -> scalar float32 CircleLoss."""
    N, D = feat.shape
    feat = feat.astype(jnp.float32)
    label = label.astype(jnp.int32)

    if block is None:
        # Fill the 256-wide MXU (v6e/v7x) and keep T >= ~2*D so col-block
        # refetch traffic stays compute-bound; cap so (T,T) temporaries fit.
        block = max(256, min(512, _round_up(2 * D, 128)))
    T = _round_up(block, 128)

    # ---------------- small batch: one fused kernel, one launch --------------
    if N <= T:
        Tp = _round_up(N, 8)
        if Tp != N:
            feat_p = jnp.pad(feat, ((0, Tp - N), (0, 0)))
            pad_lab = jnp.max(label) + 1 + jnp.arange(Tp - N, dtype=jnp.int32)
            lab_p = jnp.concatenate([label, pad_lab])
        else:
            feat_p, lab_p = feat, label
        kern = functools.partial(_fused_circle_kernel, m=float(m),
                                 gamma=float(gamma), n_valid=N, n_pad=Tp)
        pos_out, neg_out = pl.pallas_call(
            kern,
            out_shape=(jax.ShapeDtypeStruct((Tp, 1), jnp.float32),
                       jax.ShapeDtypeStruct((Tp, 1), jnp.float32)),
            grid_spec=pltpu.PrefetchScalarGridSpec(
                num_scalar_prefetch=0,
                grid=(1,),
                in_specs=[pl.BlockSpec((Tp, 1), lambda i: (0, 0)),
                          pl.BlockSpec((1, Tp), lambda i: (0, 0)),
                          pl.BlockSpec((Tp, D), lambda i: (0, 0))],
                out_specs=[pl.BlockSpec((Tp, 1), lambda i: (0, 0))] * 2,
            ),
            compiler_params=pltpu.CompilerParams(
                dimension_semantics=("arbitrary",)),
        )(lab_p.reshape(Tp, 1), lab_p.reshape(1, Tp), feat_p)
        lse_p = jax.scipy.special.logsumexp(pos_out[:, 0])
        lse_n = jax.scipy.special.logsumexp(neg_out[:, 0])
        return jax.nn.softplus(lse_n + lse_p)

    # ---------------- tiled path ----------------------------------------------
    n_pad = _round_up(N, T)
    if n_pad != N:
        feat = jnp.pad(feat, ((0, n_pad - N), (0, 0)))
        # unique sentinel labels for padded rows (no accidental positive pairs)
        pad_lab = jnp.max(label) + 1 + jnp.arange(n_pad - N, dtype=jnp.int32)
        label = jnp.concatenate([label, pad_lab])
    R = n_pad // T

    # pass 1: row-wise L2 normalization, one pass over feat.
    feat_n = pl.pallas_call(
        _l2_normalize_kernel,
        out_shape=jax.ShapeDtypeStruct((n_pad, D), jnp.float32),
        grid_spec=pltpu.PrefetchScalarGridSpec(
            num_scalar_prefetch=0,
            grid=(R,),
            in_specs=[pl.BlockSpec((T, D), lambda i: (i, 0))],
            out_specs=pl.BlockSpec((T, D), lambda i: (i, 0)),
        ),
        compiler_params=pltpu.CompilerParams(
            dimension_semantics=("parallel",)),
    )(feat)
    # One-time transposed copy (plain XLA op) so the pair matmul is a natural
    # (T, D) x (D, T) MXU op with no per-tile transpose of the column operand.
    feat_nt = jnp.transpose(feat_n)                        # (D, n_pad)

    row_ids, col_ids, flags, G, L = _triangle_schedule(R)
    n_active = R * (R + 1) // 2

    lab_rows = label.reshape(n_pad, 1)                     # row-block labels
    lab_cols = label.reshape(R, 1, T)                      # VMEM-resident cols

    kernel = functools.partial(
        _pair_lse_kernel, m=float(m), gamma=float(gamma),
        tile=T, n_valid=N, n_pad=n_pad, steps_per_group=L)

    def _row_map(g, l, row_ref, col_ref, flg_ref):
        return (row_ref[g * L + l], 0)

    def _colT_map(g, l, row_ref, col_ref, flg_ref):
        return (0, col_ref[g * L + l])

    def _resident_map(g, l, row_ref, col_ref, flg_ref):
        return (0, 0, 0)

    cost = pl.CostEstimate(
        flops=int(n_active * (2 * T * T * D + 20 * T * T)),
        transcendentals=int(2 * n_active * T * T),
        bytes_accessed=int((n_active + R) * T * D * 4 + 2 * n_pad * D * 4
                           + 4 * n_pad * 4),
    )

    # VMEM budget: double-buffered feat blocks + (T,T) temporaries + narrow
    # label/output/scratch buffers; capped at 64 MiB so it also fits v7x.
    vmem_est = 4 * (4 * T * D + 8 * T * T + 16 * T * 128 + 8 * R * T)
    vmem_limit = int(min(max(2 * vmem_est, 32 * 1024 * 1024),
                         64 * 1024 * 1024))

    pos_out, neg_out = pl.pallas_call(
        kernel,
        out_shape=(jax.ShapeDtypeStruct((n_pad, 1), jnp.float32),
                   jax.ShapeDtypeStruct((n_pad, 1), jnp.float32)),
        grid_spec=pltpu.PrefetchScalarGridSpec(
            num_scalar_prefetch=3,
            grid=(G, L),
            in_specs=[
                pl.BlockSpec((T, 1), _row_map),        # row-block labels
                pl.BlockSpec((R, 1, T), _resident_map),  # resident col labels
                pl.BlockSpec((T, D), _row_map),        # row feature block
                pl.BlockSpec((D, T), _colT_map),       # col feature block (D,T)
            ],
            out_specs=[
                pl.BlockSpec((T, 1), _row_map),        # per-row LSE (pos)
                pl.BlockSpec((T, 1), _row_map),        # per-row LSE (neg)
            ],
            scratch_shapes=[pltpu.VMEM((T, 1), jnp.float32)] * 4,
        ),
        compiler_params=pltpu.CompilerParams(
            dimension_semantics=("parallel", "arbitrary"),
            vmem_limit_bytes=vmem_limit),
        cost_estimate=cost,
    )(row_ids, col_ids, flags, lab_rows, lab_cols, feat_n, feat_nt)

    # Tiny scalar epilogue: combine per-row partial LSEs, then softplus.
    lse_p = jax.scipy.special.logsumexp(pos_out[:, 0])
    lse_n = jax.scipy.special.logsumexp(neg_out[:, 0])
    return jax.nn.softplus(lse_n + lse_p)


def _reference_circle_loss(feat, label, m, gamma):
    # Pure-JAX reference mirroring the PyTorch module.
    x = feat.astype(jnp.float32)
    norm = jnp.linalg.norm(x, axis=-1, keepdims=True)
    xn = x / jnp.maximum(norm, 1e-12)            # F.normalize semantics
    sim = xn @ xn.T
    N = x.shape[0]
    triu = jnp.triu(jnp.ones((N, N), dtype=bool), k=1)
    same = label[:, None] == label[None, :]
    pos = triu & same
    neg = triu & ~same
    ap = jnp.maximum(-sim + 1.0 + m, 0.0)
    an = jnp.maximum(sim + m, 0.0)
    logit_p = jnp.where(pos, -ap * (sim - (1.0 - m)) * gamma, -jnp.inf)
    logit_n = jnp.where(neg, an * (sim - m) * gamma, -jnp.inf)
    z = (jax.scipy.special.logsumexp(logit_n)
         + jax.scipy.special.logsumexp(logit_p))
    return jax.nn.softplus(z)


if __name__ == "__main__":
    m, gamma = 0.25, 256.0
    k1, k2, k3 = jax.random.split(jax.random.PRNGKey(0), 3)

    # 1) small batch -> fused single-block kernel (normalize + pairs + LSE).
    N, D = 96, 32
    feat = jax.random.normal(k1, (N, D), dtype=jnp.float32)
    label = jnp.arange(N, dtype=jnp.int32) % 5
    loss = jax.block_until_ready(circle_loss(feat, label, m=m, gamma=gamma))
    ref = _reference_circle_loss(feat, label, m, gamma)
    assert jnp.allclose(loss, ref, rtol=1e-3, atol=1e-3), (loss, ref)

    # 2) multi-tile path, even R (R=4 -> 2 balanced groups, no padding rows):
    #    exercises the scalar-prefetch triangular schedule + online LSE.
    N2, D2 = 512, 32
    feat2 = jax.random.normal(k2, (N2, D2), dtype=jnp.float32)
    label2 = jnp.arange(N2, dtype=jnp.int32) % 8
    loss2 = jax.block_until_ready(
        circle_loss(feat2, label2, m=m, gamma=gamma, block=128))
    ref2 = _reference_circle_loss(feat2, label2, m, gamma)
    assert jnp.allclose(loss2, ref2, rtol=1e-3, atol=1e-3), (loss2, ref2)

    # 3) ragged multi-tile path, odd R (R=3): padded rows with sentinel labels
    #    plus inactive (padding) schedule steps in the short middle group.
    N3, D3 = 300, 32
    feat3 = jax.random.normal(k3, (N3, D3), dtype=jnp.float32)
    label3 = jnp.arange(N3, dtype=jnp.int32) % 7
    loss3 = jax.block_until_ready(
        circle_loss(feat3, label3, m=m, gamma=gamma, block=128))
    ref3 = _reference_circle_loss(feat3, label3, m, gamma)
    assert jnp.allclose(loss3, ref3, rtol=1e-3, atol=1e-3), (loss3, ref3)

    print("KERNEL_OK")
</pallas_src>

<mosaic_0001>
module attributes {stable_mosaic.version = 11 : i64} {
  func.func @_fused_circle_kernel(%arg0: i32, %arg1: memref<96x1xi32, #tpu.memory_space<vmem>>, %arg2: memref<1x96xi32, #tpu.memory_space<vmem>>, %arg3: memref<96x32xf32, #tpu.memory_space<vmem>>, %arg4: memref<96x1xf32, #tpu.memory_space<vmem>>, %arg5: memref<96x1xf32, #tpu.memory_space<vmem>>) attributes {dimension_semantics = [#tpu.dimension_semantics<arbitrary>], iteration_bounds = array<i64: 1>, scalar_prefetch = 0 : i64, scratch_operands = 0 : i64, tpu.core_type = #tpu.core_type<tc>, window_params = [{pipeline_mode = #tpu.pipeline_mode<synchronous>, transform_indices = @transform_0, window_bounds = array<i64: 96, 1>}, {pipeline_mode = #tpu.pipeline_mode<synchronous>, transform_indices = @transform_1, window_bounds = array<i64: 1, 96>}, {pipeline_mode = #tpu.pipeline_mode<synchronous>, transform_indices = @transform_2, window_bounds = array<i64: 96, 32>}, {pipeline_mode = #tpu.pipeline_mode<synchronous>, transform_indices = @transform_3, window_bounds = array<i64: 96, 1>}, {pipeline_mode = #tpu.pipeline_mode<synchronous>, transform_indices = @transform_4, window_bounds = array<i64: 96, 1>}]} {
    %c0 = arith.constant 0 : index
    %c0_0 = arith.constant 0 : index
    %0 = vector.load %arg3[%c0, %c0_0] : memref<96x32xf32, #tpu.memory_space<vmem>>, vector<96x32xf32>
    %1 = arith.mulf %0, %0 : vector<96x32xf32>
    %cst = arith.constant dense<0.000000e+00> : vector<96xf32>
    %2 = vector.multi_reduction <add>, %1, %cst [1] : vector<96x32xf32> to vector<96xf32>
    %3 = vector.shape_cast %2 : vector<96xf32> to vector<96x1xf32>
    %cst_1 = arith.constant 1.000000e-24 : f32
    %4 = vector.broadcast %cst_1 : f32 to vector<96x1xf32>
    %5 = arith.maximumf %3, %4 : vector<96x1xf32>
    %6 = math.rsqrt %5 : vector<96x1xf32>
    %7 = vector.broadcast %6 : vector<96x1xf32> to vector<96x32xf32>
    %8 = arith.mulf %0, %7 : vector<96x32xf32>
    %cst_2 = arith.constant dense<0.000000e+00> : vector<96x96xf32>
    %9 = tpu.matmul %8, %8, %cst_2 {dimension_numbers = #tpu.dot_dimension_numbers<[1], [1], [0], [0], [0, 0, 1, 0], [], []>} : vector<96x32xf32>, vector<96x32xf32>, vector<96x96xf32> -> vector<96x96xf32>
    %10 = tpu.iota {dimensions = array<i32: 0>} : vector<96x96xi32>
    %11 = tpu.iota {dimensions = array<i32: 1>} : vector<96x96xi32>
    %12 = arith.cmpi sgt, %11, %10 : vector<96x96xi32>
    %c0_3 = arith.constant 0 : index
    %c0_4 = arith.constant 0 : index
    %13 = vector.load %arg1[%c0_3, %c0_4] : memref<96x1xi32, #tpu.memory_space<vmem>>, vector<96x1xi32>
    %c0_5 = arith.constant 0 : index
    %c0_6 = arith.constant 0 : index
    %14 = vector.load %arg2[%c0_5, %c0_6] : memref<1x96xi32, #tpu.memory_space<vmem>>, vector<1x96xi32>
    %15 = vector.broadcast %13 : vector<96x1xi32> to vector<96x96xi32>
    %16 = vector.broadcast %14 : vector<1x96xi32> to vector<96x96xi32>
    %17 = arith.cmpi eq, %15, %16 : vector<96x96xi32>
    %18 = arith.andi %12, %17 : vector<96x96xi1>
    %cst_7 = arith.constant 1.250000e+00 : f32
    %19 = vector.broadcast %cst_7 : f32 to vector<96x96xf32>
    %20 = arith.subf %19, %9 : vector<96x96xf32>
    %cst_8 = arith.constant 0.000000e+00 : f32
    %21 = vector.broadcast %cst_8 : f32 to vector<96x96xf32>
    %22 = arith.maximumf %20, %21 : vector<96x96xf32>
    %cst_9 = arith.constant 0.000000e+00 : f32
    %23 = vector.broadcast %cst_9 : f32 to vector<96x96xf32>
    %24 = arith.subf %23, %22 : vector<96x96xf32>
    %cst_10 = arith.constant 7.500000e-01 : f32
    %25 = vector.broadcast %cst_10 : f32 to vector<96x96xf32>
    %26 = arith.subf %9, %25 : vector<96x96xf32>
    %27 = arith.mulf %24, %26 : vector<96x96xf32>
    %cst_11 = arith.constant 2.560000e+02 : f32
    %28 = vector.broadcast %cst_11 : f32 to vector<96x96xf32>
    %29 = arith.mulf %27, %28 : vector<96x96xf32>
    %cst_12 = arith.constant 0xFF800000 : f32
    %30 = vector.broadcast %cst_12 : f32 to vector<96x96xf32>
    %31 = arith.select %18, %29, %30 : vector<96x96xi1>, vector<96x96xf32>
    %cst_13 = arith.constant dense<true> : vector<96x96xi1>
    %32 = arith.xori %17, %cst_13 : vector<96x96xi1>
    %33 = arith.andi %12, %32 : vector<96x96xi1>
    %cst_14 = arith.constant 2.500000e-01 : f32
    %34 = vector.broadcast %cst_14 : f32 to vector<96x96xf32>
    %35 = arith.addf %9, %34 : vector<96x96xf32>
    %cst_15 = arith.constant 0.000000e+00 : f32
    %36 = vector.broadcast %cst_15 : f32 to vector<96x96xf32>
    %37 = arith.maximumf %35, %36 : vector<96x96xf32>
    %cst_16 = arith.constant 2.500000e-01 : f32
    %38 = vector.broadcast %cst_16 : f32 to vector<96x96xf32>
    %39 = arith.subf %9, %38 : vector<96x96xf32>
    %40 = arith.mulf %37, %39 : vector<96x96xf32>
    %cst_17 = arith.constant 2.560000e+02 : f32
    %41 = vector.broadcast %cst_17 : f32 to vector<96x96xf32>
    %42 = arith.mulf %40, %41 : vector<96x96xf32>
    %cst_18 = arith.constant 0xFF800000 : f32
    %43 = vector.broadcast %cst_18 : f32 to vector<96x96xf32>
    %44 = arith.select %33, %42, %43 : vector<96x96xi1>, vector<96x96xf32>
    %cst_19 = arith.constant dense<0xFF800000> : vector<96xf32>
    %45 = vector.multi_reduction <maximumf>, %31, %cst_19 [1] : vector<96x96xf32> to vector<96xf32>
    %46 = vector.shape_cast %45 : vector<96xf32> to vector<96x1xf32>
    %cst_20 = arith.constant -1.000000e+30 : f32
    %47 = vector.broadcast %cst_20 : f32 to vector<96x1xf32>
    %48 = arith.maximumf %46, %47 : vector<96x1xf32>
    %49 = vector.broadcast %48 : vector<96x1xf32> to vector<96x96xf32>
    %50 = arith.subf %31, %49 : vector<96x96xf32>
    %51 = math.exp %50 : vector<96x96xf32>
    %cst_21 = arith.constant dense<0.000000e+00> : vector<96xf32>
    %52 = vector.multi_reduction <add>, %51, %cst_21 [1] : vector<96x96xf32> to vector<96xf32>
    %53 = vector.shape_cast %52 : vector<96xf32> to vector<96x1xf32>
    %54 = math.log %53 : vector<96x1xf32>
    %55 = arith.addf %48, %54 : vector<96x1xf32>
    %c0_22 = arith.constant 0 : index
    %c0_23 = arith.constant 0 : index
    %56 = vector.load %arg4[%c0_22, %c0_23] : memref<96x1xf32, #tpu.memory_space<vmem>>, vector<96x1xf32>
    tpu.vector_store %arg4[%c0_22, %c0_23], %55 {strides = array<i32>} : memref<96x1xf32, #tpu.memory_space<vmem>>, vector<96x1xf32>,
    %cst_24 = arith.constant dense<0xFF800000> : vector<96xf32>
    %57 = vector.multi_reduction <maximumf>, %44, %cst_24 [1] : vector<96x96xf32> to vector<96xf32>
    %58 = vector.shape_cast %57 : vector<96xf32> to vector<96x1xf32>
    %cst_25 = arith.constant -1.000000e+30 : f32
    %59 = vector.broadcast %cst_25 : f32 to vector<96x1xf32>
    %60 = arith.maximumf %58, %59 : vector<96x1xf32>
    %61 = vector.broadcast %60 : vector<96x1xf32> to vector<96x96xf32>
    %62 = arith.subf %44, %61 : vector<96x96xf32>
    %63 = math.exp %62 : vector<96x96xf32>
    %cst_26 = arith.constant dense<0.000000e+00> : vector<96xf32>
    %64 = vector.multi_reduction <add>, %63, %cst_26 [1] : vector<96x96xf32> to vector<96xf32>
    %65 = vector.shape_cast %64 : vector<96xf32> to vector<96x1xf32>
    %66 = math.log %65 : vector<96x1xf32>
    %67 = arith.addf %60, %66 : vector<96x1xf32>
    %c0_27 = arith.constant 0 : index
    %c0_28 = arith.constant 0 : index
    %68 = vector.load %arg5[%c0_27, %c0_28] : memref<96x1xf32, #tpu.memory_space<vmem>>, vector<96x1xf32>
    tpu.vector_store %arg5[%c0_27, %c0_28], %67 {strides = array<i32>} : memref<96x1xf32, #tpu.memory_space<vmem>>, vector<96x1xf32>,
    return
  }
  func.func @transform_0(%arg0: i32) -> (i32, i32) {
    %c0_i32 = arith.constant 0 : i32
    %c0_i32_0 = arith.constant 0 : i32
    %c0_i32_1 = arith.constant 0 : i32
    return %c0_i32, %c0_i32_0 : i32, i32
  }
  func.func @transform_1(%arg0: i32) -> (i32, i32) {
    %c0_i32 = arith.constant 0 : i32
    %c0_i32_0 = arith.constant 0 : i32
    %c0_i32_1 = arith.constant 0 : i32
    return %c0_i32, %c0_i32_0 : i32, i32
  }
  func.func @transform_2(%arg0: i32) -> (i32, i32) {
    %c0_i32 = arith.constant 0 : i32
    %c0_i32_0 = arith.constant 0 : i32
    %c0_i32_1 = arith.constant 0 : i32
    return %c0_i32, %c0_i32_0 : i32, i32
  }
  func.func @transform_3(%arg0: i32) -> (i32, i32) {
    %c0_i32 = arith.constant 0 : i32
    %c0_i32_0 = arith.constant 0 : i32
    %c0_i32_1 = arith.constant 0 : i32
    return %c0_i32, %c0_i32_0 : i32, i32
  }
  func.func @transform_4(%arg0: i32) -> (i32, i32) {
    %c0_i32 = arith.constant 0 : i32
    %c0_i32_0 = arith.constant 0 : i32
    %c0_i32_1 = arith.constant 0 : i32
    return %c0_i32, %c0_i32_0 : i32, i32
  }
}

</mosaic_0001>

<llo_original>
// kernel: tpu_custom_call.1
$region0: #{tpu_custom_call.1}
  #allocation0 [shape = 'u32[]', space=smem, size = 0x4, offset = 0x4, fixed_abs, tag = 'smem constant byte address 0x4 - core index']
  #allocation1 [shape = 'u32[72,128]{1,0:T(1,128)}', space=vmem, size = 0x9000, scoped, tag = 'internal scratch']
  %s0 = inlined_call_operand.vmem [shape: s32[96,1], index: 0, kind: input, shape index: {}]
  %s1 = inlined_call_operand.vmem [shape: s32[1,96], index: 1, kind: input, shape index: {}]
  %s2 = inlined_call_operand.vmem [shape: f32[96,32], index: 2, kind: input, shape index: {}]
  %s3 = inlined_call_operand.vmem [shape: f32[96,1], index: 3, kind: output, shape index: {0}]
  %s4 = inlined_call_operand.vmem [shape: f32[96,1], index: 4, kind: output, shape index: {1}]
  %5 = xla_tuple %s3, %s4
  %s6 = sld [smem:[#allocation0]]
  $region30: #{tpu_custom_call.1} parent=0
    _
  %s8 = ssub.s32 1, %s6
  %s9 = scalar_select 0, %s8, %s6
  // Predicated region
  $region2: #{tpu_custom_call.1} parent=0 // pred_check
    _
  $region3: #{tpu_custom_call.1} parent=0 // pred_check_branch
    %11 = sbr.rel (0) target = $region5
  $region4: #{tpu_custom_call.1} parent=0 // pred_region
    _
  $region5: #{tpu_custom_call.1} parent=0 // pred_fallthru
    _
  // Predicated region
  $region6: #{tpu_custom_call.1} parent=0 // pred_check
    _
  $region7: #{tpu_custom_call.1} parent=0 // pred_check_branch
    %13 = sbr.rel (0) target = $region9
  $region8: #{tpu_custom_call.1} parent=0 // pred_region
    _
  $region9: #{tpu_custom_call.1} parent=0 // pred_fallthru
    _
  // Predicated region
  $region10: #{tpu_custom_call.1} parent=0 // pred_check
    _
  $region11: #{tpu_custom_call.1} parent=0 // pred_check_branch
    %15 = sbr.rel (0) target = $region13
  $region12: #{tpu_custom_call.1} parent=0 // pred_region
    _
  $region13: #{tpu_custom_call.1} parent=0 // pred_fallthru
    _
  %v16 = vld [vmem:[%s2] sm:$0xff]
  %v17 = vld [vmem:[%s2 + $0x8] sm:$0xff]
  %v18 = vld [vmem:[%s2 + $0x10] sm:$0xff]
  %v19 = vld [vmem:[%s2 + $0x18] sm:$0xff]
  %v20 = vld [vmem:[%s2 + $0x20] sm:$0xff]
  %v21 = vld [vmem:[%s2 + $0x28] sm:$0xff]
  %v22 = vld [vmem:[%s2 + $0x30] sm:$0xff]
  %v23 = vld [vmem:[%s2 + $0x38] sm:$0xff]
  %v24 = vld [vmem:[%s2 + $0x40] sm:$0xff]
  %v25 = vld [vmem:[%s2 + $0x48] sm:$0xff]
  %v26 = vld [vmem:[%s2 + $0x50] sm:$0xff]
  %v27 = vld [vmem:[%s2 + $0x58] sm:$0xff]
  %v28 = vmul.f32 %v16, %v16
  %v29 = vmul.f32 %v17, %v17
  %v30 = vmul.f32 %v18, %v18
  %v31 = vmul.f32 %v19, %v19
  %v32 = vmul.f32 %v20, %v20
  %v33 = vmul.f32 %v21, %v21
  %v34 = vmul.f32 %v22, %v22
  %v35 = vmul.f32 %v23, %v23
  %v36 = vmul.f32 %v24, %v24
  %v37 = vmul.f32 %v25, %v25
  %v38 = vmul.f32 %v26, %v26
  %v39 = vmul.f32 %v27, %v27
  %vm40 = vcmask 261120
  %v41 = vsel %vm40, %v28, 0.0
  %42 = vadd.xlane.f32.xlu0 %v41
  %v43 = vpop.xlane.xlu0 %42
  %v44 = vsel %vm40, %v29, 0.0
  %45 = vadd.xlane.f32.xlu0 %v44
  %v46 = vpop.xlane.xlu0 %45
  %v47 = vsel %vm40, %v30, 0.0
  %48 = vadd.xlane.f32.xlu0 %v47
  %v49 = vpop.xlane.xlu0 %48
  %v50 = vsel %vm40, %v31, 0.0
  %51 = vadd.xlane.f32.xlu0 %v50
  %v52 = vpop.xlane.xlu0 %51
  %v53 = vsel %vm40, %v32, 0.0
  %54 = vadd.xlane.f32.xlu0 %v53
  %v55 = vpop.xlane.xlu0 %54
  %v56 = vsel %vm40, %v33, 0.0
  %57 = vadd.xlane.f32.xlu0 %v56
  %v58 = vpop.xlane.xlu0 %57
  %v59 = vsel %vm40, %v34, 0.0
  %60 = vadd.xlane.f32.xlu0 %v59
  %v61 = vpop.xlane.xlu0 %60
  %v62 = vsel %vm40, %v35, 0.0
  %63 = vadd.xlane.f32.xlu0 %v62
  %v64 = vpop.xlane.xlu0 %63
  %v65 = vsel %vm40, %v36, 0.0
  %66 = vadd.xlane.f32.xlu0 %v65
  %v67 = vpop.xlane.xlu0 %66
  %v68 = vsel %vm40, %v37, 0.0
  %69 = vadd.xlane.f32.xlu0 %v68
  %v70 = vpop.xlane.xlu0 %69
  %v71 = vsel %vm40, %v38, 0.0
  %72 = vadd.xlane.f32.xlu0 %v71
  %v73 = vpop.xlane.xlu0 %72
  %v74 = vsel %vm40, %v39, 0.0
  %75 = vadd.xlane.f32.xlu0 %v74
  %v76 = vpop.xlane.xlu0 %75
  %v77 = vmax.f32 %v43, 1e-24
  %v78 = vmax.f32 %v46, 1e-24
  %v79 = vmax.f32 %v49, 1e-24
  %v80 = vmax.f32 %v52, 1e-24
  %v81 = vmax.f32 %v55, 1e-24
  %v82 = vmax.f32 %v58, 1e-24
  %v83 = vmax.f32 %v61, 1e-24
  %v84 = vmax.f32 %v64, 1e-24
  %v85 = vmax.f32 %v67, 1e-24
  %v86 = vmax.f32 %v70, 1e-24
  %v87 = vmax.f32 %v73, 1e-24
  %v88 = vmax.f32 %v76, 1e-24
  %v89 = vrsqrt.pop %v77
  %v90 = vmul.f32 %v89, %v77
  %v91 = vmul.f32 %v90, %v89
  %v92 = vmul.f32 0.5, %v91
  %v93 = vsub.f32 1.5, %v92
  %v94 = vmul.f32 %v89, %v93
  %vm95 = vweird.f32 %v77
  %vm96 = vweird.f32 %v89
  %vm97 = vmor %vm95, %vm96
  %v98 = vsel %vm97, %v89, %v94
  %v99 = vrsqrt.pop %v78
  %v100 = vmul.f32 %v99, %v78
  %v101 = vmul.f32 %v100, %v99
  %v102 = vmul.f32 0.5, %v101
  %v103 = vsub.f32 1.5, %v102
  %v104 = vmul.f32 %v99, %v103
  %vm105 = vweird.f32 %v78
  %vm106 = vweird.f32 %v99
  %vm107 = vmor %vm105, %vm106
  %v108 = vsel %vm107, %v99, %v104
  %v109 = vrsqrt.pop %v79
  %v110 = vmul.f32 %v109, %v79
  %v111 = vmul.f32 %v110, %v109
  %v112 = vmul.f32 0.5, %v111
  %v113 = vsub.f32 1.5, %v112
  %v114 = vmul.f32 %v109, %v113
  %vm115 = vweird.f32 %v79
  %vm116 = vweird.f32 %v109
  %vm117 = vmor %vm115, %vm116
  %v118 = vsel %vm117, %v109, %v114
  %v119 = vrsqrt.pop %v80
  %v120 = vmul.f32 %v119, %v80
  %v121 = vmul.f32 %v120, %v119
  %v122 = vmul.f32 0.5, %v121
  %v123 = vsub.f32 1.5, %v122
  %v124 = vmul.f32 %v119, %v123
  %vm125 = vweird.f32 %v80
  %vm126 = vweird.f32 %v119
  %vm127 = vmor %vm125, %vm126
  %v128 = vsel %vm127, %v119, %v124
  %v129 = vrsqrt.pop %v81
  %v130 = vmul.f32 %v129, %v81
  %v131 = vmul.f32 %v130, %v129
  %v132 = vmul.f32 0.5, %v131
  %v133 = vsub.f32 1.5, %v132
  %v134 = vmul.f32 %v129, %v133
  %vm135 = vweird.f32 %v81
  %vm136 = vweird.f32 %v129
  %vm137 = vmor %vm135, %vm136
  %v138 = vsel %vm137, %v129, %v134
  %v139 = vrsqrt.pop %v82
  %v140 = vmul.f32 %v139, %v82
  %v141 = vmul.f32 %v140, %v139
  %v142 = vmul.f32 0.5, %v141
  %v143 = vsub.f32 1.5, %v142
  %v144 = vmul.f32 %v139, %v143
  %vm145 = vweird.f32 %v82
  %vm146 = vweird.f32 %v139
  %vm147 = vmor %vm145, %vm146
  %v148 = vsel %vm147, %v139, %v144
  %v149 = vrsqrt.pop %v83
  %v150 = vmul.f32 %v149, %v83
  %v151 = vmul.f32 %v150, %v149
  %v152 = vmul.f32 0.5, %v151
  %v153 = vsub.f32 1.5, %v152
  %v154 = vmul.f32 %v149, %v153
  %vm155 = vweird.f32 %v83
  %vm156 = vweird.f32 %v149
  %vm157 = vmor %vm155, %vm156
  %v158 = vsel %vm157, %v149, %v154
  %v159 = vrsqrt.pop %v84
  %v160 = vmul.f32 %v159, %v84
  %v161 = vmul.f32 %v160, %v159
  %v162 = vmul.f32 0.5, %v161
  %v163 = vsub.f32 1.5, %v162
  %v164 = vmul.f32 %v159, %v163
  %vm165 = vweird.f32 %v84
  %vm166 = vweird.f32 %v159
  %vm167 = vmor %vm165, %vm166
  %v168 = vsel %vm167, %v159, %v164
  %v169 = vrsqrt.pop %v85
  %v170 = vmul.f32 %v169, %v85
  %v171 = vmul.f32 %v170, %v169
  %v172 = vmul.f32 0.5, %v171
  %v173 = vsub.f32 1.5, %v172
  %v174 = vmul.f32 %v169, %v173
  %vm175 = vweird.f32 %v85
  %vm176 = vweird.f32 %v169
  %vm177 = vmor %vm175, %vm176
  %v178 = vsel %vm177, %v169, %v174
  %v179 = vrsqrt.pop %v86
  %v180 = vmul.f32 %v179, %v86
  %v181 = vmul.f32 %v180, %v179
  %v182 = vmul.f32 0.5, %v181
  %v183 = vsub.f32 1.5, %v182
  %v184 = vmul.f32 %v179, %v183
  %vm185 = vweird.f32 %v86
  %vm186 = vweird.f32 %v179
  %vm187 = vmor %vm185, %vm186
  %v188 = vsel %vm187, %v179, %v184
  %v189 = vrsqrt.pop %v87
  %v190 = vmul.f32 %v189, %v87
  %v191 = vmul.f32 %v190, %v189
  %v192 = vmul.f32 0.5, %v191
  %v193 = vsub.f32 1.5, %v192
  %v194 = vmul.f32 %v189, %v193
  %vm195 = vweird.f32 %v87
  %vm196 = vweird.f32 %v189
  %vm197 = vmor %vm195, %vm196
  %v198 = vsel %vm197, %v189, %v194
  %v199 = vrsqrt.pop %v88
  %v200 = vmul.f32 %v199, %v88
  %v201 = vmul.f32 %v200, %v199
  %v202 = vmul.f32 0.5, %v201
  %v203 = vsub.f32 1.5, %v202
  %v204 = vmul.f32 %v199, %v203
  %vm205 = vweird.f32 %v88
  %vm206 = vweird.f32 %v199
  %vm207 = vmor %vm205, %vm206
  %v208 = vsel %vm207, %v199, %v204
  %v209 = vmul.f32 %v16, %v98
  %v210 = vmul.f32 %v17, %v108
  %v211 = vmul.f32 %v18, %v118
  %v212 = vmul.f32 %v19, %v128
  %v213 = vmul.f32 %v20, %v138
  %v214 = vmul.f32 %v21, %v148
  %v215 = vmul.f32 %v22, %v158
  %v216 = vmul.f32 %v23, %v168
  %v217 = vmul.f32 %v24, %v178
  %v218 = vmul.f32 %v25, %v188
  %v219 = vmul.f32 %v26, %v198
  %v220 = vmul.f32 %v27, %v208
  %v222 = vsel %vm40, %v209, 0
  %v225 = vsel %vm40, %v210, 0
  %v228 = vsel %vm40, %v211, 0
  %v231 = vsel %vm40, %v212, 0
  %v234 = vsel %vm40, %v213, 0
  %v237 = vsel %vm40, %v214, 0
  %v240 = vsel %vm40, %v215, 0
  %v243 = vsel %vm40, %v216, 0
  %v246 = vsel %vm40, %v217, 0
  %v249 = vsel %vm40, %v218, 0
  %v252 = vsel %vm40, %v219, 0
  %v255 = vsel %vm40, %v220, 0
  %257 = vmatpush.xpose.msra.mxu0 0.0
  %258 = vmatpush.xpose.msra.mxu0 0.0
  %259 = vmatpush.xpose.msra.mxu0 0.0
  %260 = vmatpush.xpose.msra.mxu0 0.0
  %261 = vmatpush.xpose.msra.mxu0 %v255
  %262 = vmatpush.xpose.msra.mxu0 %v252
  %263 = vmatpush.xpose.msra.mxu0 %v249
  %264 = vmatpush.xpose.msra.mxu0 %v246
  %265 = vmatpush.xpose.msra.mxu0 %v243
  %266 = vmatpush.xpose.msra.mxu0 %v240
  %267 = vmatpush.xpose.msra.mxu0 %v237
  %268 = vmatpush.xpose.msra.mxu0 %v234
  %269 = vmatpush.xpose.msra.mxu0 %v231
  %270 = vmatpush.xpose.msra.mxu0 %v228
  %271 = vmatpush.xpose.msra.mxu0 %v225
  %272 = vmatpush.xpose.msra.mxu0 %v222
  %273 = vmatmul.f32.gmra.mxu0 %v222
  %v274 = vpop.f32.mrf.mxu0
  %v275 = vadd.f32 0.0, %v274
  %276 = vmatmul.f32.gmra.mxu0 %v225
  %v277 = vpop.f32.mrf.mxu0
  %v278 = vadd.f32 0.0, %v277
  %279 = vmatmul.f32.gmra.mxu0 %v228
  %v280 = vpop.f32.mrf.mxu0
  %v281 = vadd.f32 0.0, %v280
  %282 = vmatmul.f32.gmra.mxu0 %v231
  %v283 = vpop.f32.mrf.mxu0
  %v284 = vadd.f32 0.0, %v283
  %285 = vmatmul.f32.gmra.mxu0 %v234
  %v286 = vpop.f32.mrf.mxu0
  %v287 = vadd.f32 0.0, %v286
  %288 = vmatmul.f32.gmra.mxu0 %v237
  %v289 = vpop.f32.mrf.mxu0
  %v290 = vadd.f32 0.0, %v289
  %291 = vmatmul.f32.gmra.mxu0 %v240
  %v292 = vpop.f32.mrf.mxu0
  %v293 = vadd.f32 0.0, %v292
  %294 = vmatmul.f32.gmra.mxu0 %v243
  %v295 = vpop.f32.mrf.mxu0
  %v296 = vadd.f32 0.0, %v295
  %297 = vmatmul.f32.gmra.mxu0 %v246
  %v298 = vpop.f32.mrf.mxu0
  %v299 = vadd.f32 0.0, %v298
  %300 = vmatmul.f32.gmra.mxu0 %v249
  %v301 = vpop.f32.mrf.mxu0
  %v302 = vadd.f32 0.0, %v301
  %303 = vmatmul.f32.gmra.mxu0 %v252
  %v304 = vpop.f32.mrf.mxu0
  %v305 = vadd.f32 0.0, %v304
  %306 = vmatmul.f32.gmra.mxu0 %v255
  %v307 = vpop.f32.mrf.mxu0
  %v308 = vadd.f32 0.0, %v307
  %309 = vdwg.mxu0
  %v310 = vlaneseq
  %v311 = vshrl.u32 %v310, 7
  %v312 = vadd.s32 %v311, 8
  %v313 = vadd.s32 %v311, 16
  %v314 = vadd.s32 %v311, 24
  %v315 = vadd.s32 %v311, 32
  %v316 = vadd.s32 %v311, 40
  %v317 = vadd.s32 %v311, 48
  %v318 = vadd.s32 %v311, 56
  %v319 = vadd.s32 %v311, 64
  %v320 = vadd.s32 %v311, 72
  %v321 = vadd.s32 %v311, 80
  %v322 = vadd.s32 %v311, 88
  %v323 = vlaneseq
  %v324 = vand.u32 %v323, 127
  %vm325 = vcmp.gt.s32.totalorder %v324, %v311
  %vm326 = vcmp.gt.s32.totalorder %v324, %v312
  %vm327 = vcmp.gt.s32.totalorder %v324, %v313
  %vm328 = vcmp.gt.s32.totalorder %v324, %v314
  %vm329 = vcmp.gt.s32.totalorder %v324, %v315
  %vm330 = vcmp.gt.s32.totalorder %v324, %v316
  %vm331 = vcmp.gt.s32.totalorder %v324, %v317
  %vm332 = vcmp.gt.s32.totalorder %v324, %v318
  %vm333 = vcmp.gt.s32.totalorder %v324, %v319
  %vm334 = vcmp.gt.s32.totalorder %v324, %v320
  %vm335 = vcmp.gt.s32.totalorder %v324, %v321
  %vm336 = vcmp.gt.s32.totalorder %v324, %v322
  %v337 = vld [vmem:[%s0] sm:$0xff]
  %v338 = vld [vmem:[%s0 + $0x8] sm:$0xff]
  %v339 = vld [vmem:[%s0 + $0x10] sm:$0xff]
  %v340 = vld [vmem:[%s0 + $0x18] sm:$0xff]
  %v341 = vld [vmem:[%s0 + $0x20] sm:$0xff]
  %v342 = vld [vmem:[%s0 + $0x28] sm:$0xff]
  %v343 = vld [vmem:[%s0 + $0x30] sm:$0xff]
  %v344 = vld [vmem:[%s0 + $0x38] sm:$0xff]
  %v345 = vld [vmem:[%s0 + $0x40] sm:$0xff]
  %v346 = vld [vmem:[%s0 + $0x48] sm:$0xff]
  %v347 = vld [vmem:[%s0 + $0x50] sm:$0xff]
  %v348 = vld [vmem:[%s0 + $0x58] sm:$0xff]
  %v349 = vld [vmem:[%s1] sm:$0x1]
  %350 = vset.pattern.permute.xlu0 0
  %351 = vperm.xlu0 %350, %v337
  %v352 = vpop.permute.xlu0 %351
  %353 = vset.pattern.permute.xlu0 0
  %354 = vperm.xlu0 %353, %v338
  %v355 = vpop.permute.xlu0 %354
  %356 = vset.pattern.permute.xlu0 0
  %357 = vperm.xlu0 %356, %v339
  %v358 = vpop.permute.xlu0 %357
  %359 = vset.pattern.permute.xlu0 0
  %360 = vperm.xlu0 %359, %v340
  %v361 = vpop.permute.xlu0 %360
  %362 = vset.pattern.permute.xlu0 0
  %363 = vperm.xlu0 %362, %v341
  %v364 = vpop.permute.xlu0 %363
  %365 = vset.pattern.permute.xlu0 0
  %366 = vperm.xlu0 %365, %v342
  %v367 = vpop.permute.xlu0 %366
  %368 = vset.pattern.permute.xlu0 0
  %369 = vperm.xlu0 %368, %v343
  %v370 = vpop.permute.xlu0 %369
  %371 = vset.pattern.permute.xlu0 0
  %372 = vperm.xlu0 %371, %v344
  %v373 = vpop.permute.xlu0 %372
  %374 = vset.pattern.permute.xlu0 0
  %375 = vperm.xlu0 %374, %v345
  %v376 = vpop.permute.xlu0 %375
  %377 = vset.pattern.permute.xlu0 0
  %378 = vperm.xlu0 %377, %v346
  %v379 = vpop.permute.xlu0 %378
  %380 = vset.pattern.permute.xlu0 0
  %381 = vperm.xlu0 %380, %v347
  %v382 = vpop.permute.xlu0 %381
  %383 = vset.pattern.permute.xlu0 0
  %384 = vperm.xlu0 %383, %v348
  %v385 = vpop.permute.xlu0 %384
  %v386 = vperm.slane %v349, 0
  %vm387 = vcmp.eq.s32.totalorder %v352, %v386
  %vm388 = vcmp.eq.s32.totalorder %v355, %v386
  %vm389 = vcmp.eq.s32.totalorder %v358, %v386
  %vm390 = vcmp.eq.s32.totalorder %v361, %v386
  %vm391 = vcmp.eq.s32.totalorder %v364, %v386
  %vm392 = vcmp.eq.s32.totalorder %v367, %v386
  %vm393 = vcmp.eq.s32.totalorder %v370, %v386
  %vm394 = vcmp.eq.s32.totalorder %v373, %v386
  %vm395 = vcmp.eq.s32.totalorder %v376, %v386
  %vm396 = vcmp.eq.s32.totalorder %v379, %v386
  %vm397 = vcmp.eq.s32.totalorder %v382, %v386
  %vm398 = vcmp.eq.s32.totalorder %v385, %v386
  %vm399 = vmand %vm325, %vm387
  %vm400 = vmand %vm326, %vm388
  %vm401 = vmand %vm327, %vm389
  %vm402 = vmand %vm328, %vm390
  %vm403 = vmand %vm329, %vm391
  %vm404 = vmand %vm330, %vm392
  %vm405 = vmand %vm331, %vm393
  %vm406 = vmand %vm332, %vm394
  %vm407 = vmand %vm333, %vm395
  %vm408 = vmand %vm334, %vm396
  %vm409 = vmand %vm335, %vm397
  %vm410 = vmand %vm336, %vm398
  %v411 = vsub.f32 1.25, %v275
  %v412 = vsub.f32 1.25, %v278
  %v413 = vsub.f32 1.25, %v281
  %v414 = vsub.f32 1.25, %v284
  %v415 = vsub.f32 1.25, %v287
  %v416 = vsub.f32 1.25, %v290
  %v417 = vsub.f32 1.25, %v293
  %v418 = vsub.f32 1.25, %v296
  %v419 = vsub.f32 1.25, %v299
  %v420 = vsub.f32 1.25, %v302
  %v421 = vsub.f32 1.25, %v305
  %v422 = vsub.f32 1.25, %v308
  %v423 = vmax.f32 %v411, 0.0
  %v424 = vmax.f32 %v412, 0.0
  %v425 = vmax.f32 %v413, 0.0
  %v426 = vmax.f32 %v414, 0.0
  %v427 = vmax.f32 %v415, 0.0
  %v428 = vmax.f32 %v416, 0.0
  %v429 = vmax.f32 %v417, 0.0
  %v430 = vmax.f32 %v418, 0.0
  %v431 = vmax.f32 %v419, 0.0
  %v432 = vmax.f32 %v420, 0.0
  %v433 = vmax.f32 %v421, 0.0
  %v434 = vmax.f32 %v422, 0.0
  %v435 = vsub.f32 0.0, %v423
  %v436 = vsub.f32 0.0, %v424
  %v437 = vsub.f32 0.0, %v425
  %v438 = vsub.f32 0.0, %v426
  %v439 = vsub.f32 0.0, %v427
  %v440 = vsub.f32 0.0, %v428
  %v441 = vsub.f32 0.0, %v429
  %v442 = vsub.f32 0.0, %v430
  %v443 = vsub.f32 0.0, %v431
  %v444 = vsub.f32 0.0, %v432
  %v445 = vsub.f32 0.0, %v433
  %v446 = vsub.f32 0.0, %v434
  %v447 = vsub.f32 %v275, 0.75
  %v448 = vsub.f32 %v278, 0.75
  %v449 = vsub.f32 %v281, 0.75
  %v450 = vsub.f32 %v284, 0.75
  %v451 = vsub.f32 %v287, 0.75
  %v452 = vsub.f32 %v290, 0.75
  %v453 = vsub.f32 %v293, 0.75
  %v454 = vsub.f32 %v296, 0.75
  %v455 = vsub.f32 %v299, 0.75
  %v456 = vsub.f32 %v302, 0.75
  %v457 = vsub.f32 %v305, 0.75
  %v458 = vsub.f32 %v308, 0.75
  %v459 = vmul.f32 %v435, %v447
  %v460 = vmul.f32 %v436, %v448
  %v461 = vmul.f32 %v437, %v449
  %v462 = vmul.f32 %v438, %v450
  %v463 = vmul.f32 %v439, %v451
  %v464 = vmul.f32 %v440, %v452
  %v465 = vmul.f32 %v441, %v453
  %v466 = vmul.f32 %v442, %v454
  %v467 = vmul.f32 %v443, %v455
  %v468 = vmul.f32 %v444, %v456
  %v469 = vmul.f32 %v445, %v457
  %v470 = vmul.f32 %v446, %v458
  %v471 = vmul.f32 %v459, 256.0
  %v472 = vmul.f32 %v460, 256.0
  %v473 = vmul.f32 %v461, 256.0
  %v474 = vmul.f32 %v462, 256.0
  %v475 = vmul.f32 %v463, 256.0
  %v476 = vmul.f32 %v464, 256.0
  %v477 = vmul.f32 %v465, 256.0
  %v478 = vmul.f32 %v466, 256.0
  %v479 = vmul.f32 %v467, 256.0
  %v480 = vmul.f32 %v468, 256.0
  %v481 = vmul.f32 %v469, 256.0
  %v482 = vmul.f32 %v470, 256.0
  %v483 = vsel %vm399, %v471, -inf
  %v484 = vsel %vm400, %v472, -inf
  %v485 = vsel %vm401, %v473, -inf
  %v486 = vsel %vm402, %v474, -inf
  %v487 = vsel %vm403, %v475, -inf
  %v488 = vsel %vm404, %v476, -inf
  %v489 = vsel %vm405, %v477, -inf
  %v490 = vsel %vm406, %v478, -inf
  %v491 = vsel %vm407, %v479, -inf
  %v492 = vsel %vm408, %v480, -inf
  %v493 = vsel %vm409, %v481, -inf
  %v494 = vsel %vm410, %v482, -inf
  %vm495 = vmxor %vm387, 1
  %vm496 = vmxor %vm388, 1
  %vm497 = vmxor %vm389, 1
  %vm498 = vmxor %vm390, 1
  %vm499 = vmxor %vm391, 1
  %vm500 = vmxor %vm392, 1
  %vm501 = vmxor %vm393, 1
  %vm502 = vmxor %vm394, 1
  %vm503 = vmxor %vm395, 1
  %vm504 = vmxor %vm396, 1
  %vm505 = vmxor %vm397, 1
  %vm506 = vmxor %vm398, 1
  %vm507 = vmand %vm325, %vm495
  %vm508 = vmand %vm326, %vm496
  %vm509 = vmand %vm327, %vm497
  %vm510 = vmand %vm328, %vm498
  %vm511 = vmand %vm329, %vm499
  %vm512 = vmand %vm330, %vm500
  %vm513 = vmand %vm331, %vm501
  %vm514 = vmand %vm332, %vm502
  %vm515 = vmand %vm333, %vm503
  %vm516 = vmand %vm334, %vm504
  %vm517 = vmand %vm335, %vm505
  %vm518 = vmand %vm336, %vm506
  %v519 = vadd.f32 %v275, 0.25
  %v520 = vadd.f32 %v278, 0.25
  %v521 = vadd.f32 %v281, 0.25
  %v522 = vadd.f32 %v284, 0.25
  %v523 = vadd.f32 %v287, 0.25
  %v524 = vadd.f32 %v290, 0.25
  %v525 = vadd.f32 %v293, 0.25
  %v526 = vadd.f32 %v296, 0.25
  %v527 = vadd.f32 %v299, 0.25
  %v528 = vadd.f32 %v302, 0.25
  %v529 = vadd.f32 %v305, 0.25
  %v530 = vadd.f32 %v308, 0.25
  %v531 = vmax.f32 %v519, 0.0
  %v532 = vmax.f32 %v520, 0.0
  %v533 = vmax.f32 %v521, 0.0
  %v534 = vmax.f32 %v522, 0.0
  %v535 = vmax.f32 %v523, 0.0
  %v536 = vmax.f32 %v524, 0.0
  %v537 = vmax.f32 %v525, 0.0
  %v538 = vmax.f32 %v526, 0.0
  %v539 = vmax.f32 %v527, 0.0
  %v540 = vmax.f32 %v528, 0.0
  %v541 = vmax.f32 %v529, 0.0
  %v542 = vmax.f32 %v530, 0.0
  %v543 = vsub.f32 %v275, 0.25
  %v544 = vsub.f32 %v278, 0.25
  %v545 = vsub.f32 %v281, 0.25
  %v546 = vsub.f32 %v284, 0.25
  %v547 = vsub.f32 %v287, 0.25
  %v548 = vsub.f32 %v290, 0.25
  %v549 = vsub.f32 %v293, 0.25
  %v550 = vsub.f32 %v296, 0.25
  %v551 = vsub.f32 %v299, 0.25
  %v552 = vsub.f32 %v302, 0.25
  %v553 = vsub.f32 %v305, 0.25
  %v554 = vsub.f32 %v308, 0.25
  %v555 = vmul.f32 %v531, %v543
  %v556 = vmul.f32 %v532, %v544
  %v557 = vmul.f32 %v533, %v545
  %v558 = vmul.f32 %v534, %v546
  %v559 = vmul.f32 %v535, %v547
  %v560 = vmul.f32 %v536, %v548
  %v561 = vmul.f32 %v537, %v549
  %v562 = vmul.f32 %v538, %v550
  %v563 = vmul.f32 %v539, %v551
  %v564 = vmul.f32 %v540, %v552
  %v565 = vmul.f32 %v541, %v553
  %v566 = vmul.f32 %v542, %v554
  %v567 = vmul.f32 %v555, 256.0
  %v568 = vmul.f32 %v556, 256.0
  %v569 = vmul.f32 %v557, 256.0
  %v570 = vmul.f32 %v558, 256.0
  %v571 = vmul.f32 %v559, 256.0
  %v572 = vmul.f32 %v560, 256.0
  %v573 = vmul.f32 %v561, 256.0
  %v574 = vmul.f32 %v562, 256.0
  %v575 = vmul.f32 %v563, 256.0
  %v576 = vmul.f32 %v564, 256.0
  %v577 = vmul.f32 %v565, 256.0
  %v578 = vmul.f32 %v566, 256.0
  %v579 = vsel %vm507, %v567, -inf
  %v580 = vsel %vm508, %v568, -inf
  %v581 = vsel %vm509, %v569, -inf
  %v582 = vsel %vm510, %v570, -inf
  %v583 = vsel %vm511, %v571, -inf
  %v584 = vsel %vm512, %v572, -inf
  %v585 = vsel %vm513, %v573, -inf
  %v586 = vsel %vm514, %v574, -inf
  %v587 = vsel %vm515, %v575, -inf
  %v588 = vsel %vm516, %v576, -inf
  %v589 = vsel %vm517, %v577, -inf
  %v590 = vsel %vm518, %v578, -inf
  %vm591 = vcmask 785408
  %v592 = vsel %vm591, %v483, -inf
  %593 = vmax.xlane.f32.xlu0 %v592
  %v594 = vpop.xlane.xlu0 %593
  %v595 = vsel %vm591, %v484, -inf
  %596 = vmax.xlane.f32.xlu0 %v595
  %v597 = vpop.xlane.xlu0 %596
  %v598 = vsel %vm591, %v485, -inf
  %599 = vmax.xlane.f32.xlu0 %v598
  %v600 = vpop.xlane.xlu0 %599
  %v601 = vsel %vm591, %v486, -inf
  %602 = vmax.xlane.f32.xlu0 %v601
  %v603 = vpop.xlane.xlu0 %602
  %v604 = vsel %vm591, %v487, -inf
  %605 = vmax.xlane.f32.xlu0 %v604
  %v606 = vpop.xlane.xlu0 %605
  %v607 = vsel %vm591, %v488, -inf
  %608 = vmax.xlane.f32.xlu0 %v607
  %v609 = vpop.xlane.xlu0 %608
  %v610 = vsel %vm591, %v489, -inf
  %611 = vmax.xlane.f32.xlu0 %v610
  %v612 = vpop.xlane.xlu0 %611
  %v613 = vsel %vm591, %v490, -inf
  %614 = vmax.xlane.f32.xlu0 %v613
  %v615 = vpop.xlane.xlu0 %614
  %v616 = vsel %vm591, %v491, -inf
  %617 = vmax.xlane.f32.xlu0 %v616
  %v618 = vpop.xlane.xlu0 %617
  %v619 = vsel %vm591, %v492, -inf
  %620 = vmax.xlane.f32.xlu0 %v619
  %v621 = vpop.xlane.xlu0 %620
  %v622 = vsel %vm591, %v493, -inf
  %623 = vmax.xlane.f32.xlu0 %v622
  %v624 = vpop.xlane.xlu0 %623
  %v625 = vsel %vm591, %v494, -inf
  %626 = vmax.xlane.f32.xlu0 %v625
  %v627 = vpop.xlane.xlu0 %626
  %v628 = vmax.f32 %v594, -1e+30
  %v629 = vmax.f32 %v597, -1e+30
  %v630 = vmax.f32 %v600, -1e+30
  %v631 = vmax.f32 %v603, -1e+30
  %v632 = vmax.f32 %v606, -1e+30
  %v633 = vmax.f32 %v609, -1e+30
  %v634 = vmax.f32 %v612, -1e+30
  %v635 = vmax.f32 %v615, -1e+30
  %v636 = vmax.f32 %v618, -1e+30
  %v637 = vmax.f32 %v621, -1e+30
  %v638 = vmax.f32 %v624, -1e+30
  %v639 = vmax.f32 %v627, -1e+30
  %v640 = vsub.f32 %v483, %v628
  %v641 = vsub.f32 %v484, %v629
  %v642 = vsub.f32 %v485, %v630
  %v643 = vsub.f32 %v486, %v631
  %v644 = vsub.f32 %v487, %v632
  %v645 = vsub.f32 %v488, %v633
  %v646 = vsub.f32 %v489, %v634
  %v647 = vsub.f32 %v490, %v635
  %v648 = vsub.f32 %v491, %v636
  %v649 = vsub.f32 %v492, %v637
  %v650 = vsub.f32 %v493, %v638
  %v651 = vsub.f32 %v494, %v639
  %v652 = vmul.f32 %v640, 1.442695
  %v653 = vpow.pop %v652
  %v654 = vmul.f32 %v641, 1.442695
  %v655 = vpow.pop %v654
  %v656 = vmul.f32 %v642, 1.442695
  %v657 = vpow.pop %v656
  %v658 = vmul.f32 %v643, 1.442695
  %v659 = vpow.pop %v658
  %v660 = vmul.f32 %v644, 1.442695
  %v661 = vpow.pop %v660
  %v662 = vmul.f32 %v645, 1.442695
  %v663 = vpow.pop %v662
  %v664 = vmul.f32 %v646, 1.442695
  %v665 = vpow.pop %v664
  %v666 = vmul.f32 %v647, 1.442695
  %v667 = vpow.pop %v666
  %v668 = vmul.f32 %v648, 1.442695
  %v669 = vpow.pop %v668
  %v670 = vmul.f32 %v649, 1.442695
  %v671 = vpow.pop %v670
  %v672 = vmul.f32 %v650, 1.442695
  %v673 = vpow.pop %v672
  %v674 = vmul.f32 %v651, 1.442695
  %v675 = vpow.pop %v674
  %v676 = vsel %vm591, %v653, 0.0
  %677 = vadd.xlane.f32.xlu0 %v676
  %v678 = vpop.xlane.xlu0 %677
  %v679 = vsel %vm591, %v655, 0.0
  %680 = vadd.xlane.f32.xlu0 %v679
  %v681 = vpop.xlane.xlu0 %680
  %v682 = vsel %vm591, %v657, 0.0
  %683 = vadd.xlane.f32.xlu0 %v682
  %v684 = vpop.xlane.xlu0 %683
  %v685 = vsel %vm591, %v659, 0.0
  %686 = vadd.xlane.f32.xlu0 %v685
  %v687 = vpop.xlane.xlu0 %686
  %v688 = vsel %vm591, %v661, 0.0
  %689 = vadd.xlane.f32.xlu0 %v688
  %v690 = vpop.xlane.xlu0 %689
  %v691 = vsel %vm591, %v663, 0.0
  %692 = vadd.xlane.f32.xlu0 %v691
  %v693 = vpop.xlane.xlu0 %692
  %v694 = vsel %vm591, %v665, 0.0
  %695 = vadd.xlane.f32.xlu0 %v694
  %v696 = vpop.xlane.xlu0 %695
  %v697 = vsel %vm591, %v667, 0.0
  %698 = vadd.xlane.f32.xlu0 %v697
  %v699 = vpop.xlane.xlu0 %698
  %v700 = vsel %vm591, %v669, 0.0
  %701 = vadd.xlane.f32.xlu0 %v700
  %v702 = vpop.xlane.xlu0 %701
  %v703 = vsel %vm591, %v671, 0.0
  %704 = vadd.xlane.f32.xlu0 %v703
  %v705 = vpop.xlane.xlu0 %704
  %v706 = vsel %vm591, %v673, 0.0
  %707 = vadd.xlane.f32.xlu0 %v706
  %v708 = vpop.xlane.xlu0 %707
  %v709 = vsel %vm591, %v675, 0.0
  %710 = vadd.xlane.f32.xlu0 %v709
  %v711 = vpop.xlane.xlu0 %710
  %v712 = vlog2.pop %v678
  %v713 = vmul.f32 %v712, 0.6931472
  %v714 = vlog2.pop %v681
  %v715 = vmul.f32 %v714, 0.6931472
  %v716 = vlog2.pop %v684
  %v717 = vmul.f32 %v716, 0.6931472
  %v718 = vlog2.pop %v687
  %v719 = vmul.f32 %v718, 0.6931472
  %v720 = vlog2.pop %v690
  %v721 = vmul.f32 %v720, 0.6931472
  %v722 = vlog2.pop %v693
  %v723 = vmul.f32 %v722, 0.6931472
  %v724 = vlog2.pop %v696
  %v725 = vmul.f32 %v724, 0.6931472
  %v726 = vlog2.pop %v699
  %v727 = vmul.f32 %v726, 0.6931472
  %v728 = vlog2.pop %v702
  %v729 = vmul.f32 %v728, 0.6931472
  %v730 = vlog2.pop %v705
  %v731 = vmul.f32 %v730, 0.6931472
  %v732 = vlog2.pop %v708
  %v733 = vmul.f32 %v732, 0.6931472
  %v734 = vlog2.pop %v711
  %v735 = vmul.f32 %v734, 0.6931472
  %v736 = vadd.f32 %v628, %v713
  %v737 = vadd.f32 %v629, %v715
  %v738 = vadd.f32 %v630, %v717
  %v739 = vadd.f32 %v631, %v719
  %v740 = vadd.f32 %v632, %v721
  %v741 = vadd.f32 %v633, %v723
  %v742 = vadd.f32 %v634, %v725
  %v743 = vadd.f32 %v635, %v727
  %v744 = vadd.f32 %v636, %v729
  %v745 = vadd.f32 %v637, %v731
  %v746 = vadd.f32 %v638, %v733
  %v747 = vadd.f32 %v639, %v735
  %vm748 = vcmask 7168
  %749 = vst.msk [vmem:[%s3] sm:$0xff] %vm748, %v736
  %750 = vst.msk [vmem:[%s3 + $0x8] sm:$0xff] %vm748, %v737
  %751 = vst.msk [vmem:[%s3 + $0x10] sm:$0xff] %vm748, %v738
  %752 = vst.msk [vmem:[%s3 + $0x18] sm:$0xff] %vm748, %v739
  %753 = vst.msk [vmem:[%s3 + $0x20] sm:$0xff] %vm748, %v740
  %754 = vst.msk [vmem:[%s3 + $0x28] sm:$0xff] %vm748, %v741
  %755 = vst.msk [vmem:[%s3 + $0x30] sm:$0xff] %vm748, %v742
  %756 = vst.msk [vmem:[%s3 + $0x38] sm:$0xff] %vm748, %v743
  %757 = vst.msk [vmem:[%s3 + $0x40] sm:$0xff] %vm748, %v744
  %758 = vst.msk [vmem:[%s3 + $0x48] sm:$0xff] %vm748, %v745
  %759 = vst.msk [vmem:[%s3 + $0x50] sm:$0xff] %vm748, %v746
  %760 = vst.msk [vmem:[%s3 + $0x58] sm:$0xff] %vm748, %v747
  %v761 = vsel %vm591, %v579, -inf
  %762 = vmax.xlane.f32.xlu0 %v761
  %v763 = vpop.xlane.xlu0 %762
  %v764 = vsel %vm591, %v580, -inf
  %765 = vmax.xlane.f32.xlu0 %v764
  %v766 = vpop.xlane.xlu0 %765
  %v767 = vsel %vm591, %v581, -inf
  %768 = vmax.xlane.f32.xlu0 %v767
  %v769 = vpop.xlane.xlu0 %768
  %v770 = vsel %vm591, %v582, -inf
  %771 = vmax.xlane.f32.xlu0 %v770
  %v772 = vpop.xlane.xlu0 %771
  %v773 = vsel %vm591, %v583, -inf
  %774 = vmax.xlane.f32.xlu0 %v773
  %v775 = vpop.xlane.xlu0 %774
  %v776 = vsel %vm591, %v584, -inf
  %777 = vmax.xlane.f32.xlu0 %v776
  %v778 = vpop.xlane.xlu0 %777
  %v779 = vsel %vm591, %v585, -inf
  %780 = vmax.xlane.f32.xlu0 %v779
  %v781 = vpop.xlane.xlu0 %780
  %v782 = vsel %vm591, %v586, -inf
  %783 = vmax.xlane.f32.xlu0 %v782
  %v784 = vpop.xlane.xlu0 %783
  %v785 = vsel %vm591, %v587, -inf
  %786 = vmax.xlane.f32.xlu0 %v785
  %v787 = vpop.xlane.xlu0 %786
  %v788 = vsel %vm591, %v588, -inf
  %789 = vmax.xlane.f32.xlu0 %v788
  %v790 = vpop.xlane.xlu0 %789
  %v791 = vsel %vm591, %v589, -inf
  %792 = vmax.xlane.f32.xlu0 %v791
  %v793 = vpop.xlane.xlu0 %792
  %v794 = vsel %vm591, %v590, -inf
  %795 = vmax.xlane.f32.xlu0 %v794
  %v796 = vpop.xlane.xlu0 %795
  %v797 = vmax.f32 %v763, -1e+30
  %v798 = vmax.f32 %v766, -1e+30
  %v799 = vmax.f32 %v769, -1e+30
  %v800 = vmax.f32 %v772, -1e+30
  %v801 = vmax.f32 %v775, -1e+30
  %v802 = vmax.f32 %v778, -1e+30
  %v803 = vmax.f32 %v781, -1e+30
  %v804 = vmax.f32 %v784, -1e+30
  %v805 = vmax.f32 %v787, -1e+30
  %v806 = vmax.f32 %v790, -1e+30
  %v807 = vmax.f32 %v793, -1e+30
  %v808 = vmax.f32 %v796, -1e+30
  %v809 = vsub.f32 %v579, %v797
  %v810 = vsub.f32 %v580, %v798
  %v811 = vsub.f32 %v581, %v799
  %v812 = vsub.f32 %v582, %v800
  %v813 = vsub.f32 %v583, %v801
  %v814 = vsub.f32 %v584, %v802
  %v815 = vsub.f32 %v585, %v803
  %v816 = vsub.f32 %v586, %v804
  %v817 = vsub.f32 %v587, %v805
  %v818 = vsub.f32 %v588, %v806
  %v819 = vsub.f32 %v589, %v807
  %v820 = vsub.f32 %v590, %v808
  %v821 = vmul.f32 %v809, 1.442695
  %v822 = vpow.pop %v821
  %v823 = vmul.f32 %v810, 1.442695
  %v824 = vpow.pop %v823
  %v825 = vmul.f32 %v811, 1.442695
  %v826 = vpow.pop %v825
  %v827 = vmul.f32 %v812, 1.442695
  %v828 = vpow.pop %v827
  %v829 = vmul.f32 %v813, 1.442695
  %v830 = vpow.pop %v829
  %v831 = vmul.f32 %v814, 1.442695
  %v832 = vpow.pop %v831
  %v833 = vmul.f32 %v815, 1.442695
  %v834 = vpow.pop %v833
  %v835 = vmul.f32 %v816, 1.442695
  %v836 = vpow.pop %v835
  %v837 = vmul.f32 %v817, 1.442695
  %v838 = vpow.pop %v837
  %v839 = vmul.f32 %v818, 1.442695
  %v840 = vpow.pop %v839
  %v841 = vmul.f32 %v819, 1.442695
  %v842 = vpow.pop %v841
  %v843 = vmul.f32 %v820, 1.442695
  %v844 = vpow.pop %v843
  %v845 = vsel %vm591, %v822, 0.0
  %846 = vadd.xlane.f32.xlu0 %v845
  %v847 = vpop.xlane.xlu0 %846
  %v848 = vsel %vm591, %v824, 0.0
  %849 = vadd.xlane.f32.xlu0 %v848
  %v850 = vpop.xlane.xlu0 %849
  %v851 = vsel %vm591, %v826, 0.0
  %852 = vadd.xlane.f32.xlu0 %v851
  %v853 = vpop.xlane.xlu0 %852
  %v854 = vsel %vm591, %v828, 0.0
  %855 = vadd.xlane.f32.xlu0 %v854
  %v856 = vpop.xlane.xlu0 %855
  %v857 = vsel %vm591, %v830, 0.0
  %858 = vadd.xlane.f32.xlu0 %v857
  %v859 = vpop.xlane.xlu0 %858
  %v860 = vsel %vm591, %v832, 0.0
  %861 = vadd.xlane.f32.xlu0 %v860
  %v862 = vpop.xlane.xlu0 %861
  %v863 = vsel %vm591, %v834, 0.0
  %864 = vadd.xlane.f32.xlu0 %v863
  %v865 = vpop.xlane.xlu0 %864
  %v866 = vsel %vm591, %v836, 0.0
  %867 = vadd.xlane.f32.xlu0 %v866
  %v868 = vpop.xlane.xlu0 %867
  %v869 = vsel %vm591, %v838, 0.0
  %870 = vadd.xlane.f32.xlu0 %v869
  %v871 = vpop.xlane.xlu0 %870
  %v872 = vsel %vm591, %v840, 0.0
  %873 = vadd.xlane.f32.xlu0 %v872
  %v874 = vpop.xlane.xlu0 %873
  %v875 = vsel %vm591, %v842, 0.0
  %876 = vadd.xlane.f32.xlu0 %v875
  %v877 = vpop.xlane.xlu0 %876
  %v878 = vsel %vm591, %v844, 0.0
  %879 = vadd.xlane.f32.xlu0 %v878
  %v880 = vpop.xlane.xlu0 %879
  %v881 = vlog2.pop %v847
  %v882 = vmul.f32 %v881, 0.6931472
  %v883 = vlog2.pop %v850
  %v884 = vmul.f32 %v883, 0.6931472
  %v885 = vlog2.pop %v853
  %v886 = vmul.f32 %v885, 0.6931472
  %v887 = vlog2.pop %v856
  %v888 = vmul.f32 %v887, 0.6931472
  %v889 = vlog2.pop %v859
  %v890 = vmul.f32 %v889, 0.6931472
  %v891 = vlog2.pop %v862
  %v892 = vmul.f32 %v891, 0.6931472
  %v893 = vlog2.pop %v865
  %v894 = vmul.f32 %v893, 0.6931472
  %v895 = vlog2.pop %v868
  %v896 = vmul.f32 %v895, 0.6931472
  %v897 = vlog2.pop %v871
  %v898 = vmul.f32 %v897, 0.6931472
  %v899 = vlog2.pop %v874
  %v900 = vmul.f32 %v899, 0.6931472
  %v901 = vlog2.pop %v877
  %v902 = vmul.f32 %v901, 0.6931472
  %v903 = vlog2.pop %v880
  %v904 = vmul.f32 %v903, 0.6931472
  %v905 = vadd.f32 %v797, %v882
  %v906 = vadd.f32 %v798, %v884
  %v907 = vadd.f32 %v799, %v886
  %v908 = vadd.f32 %v800, %v888
  %v909 = vadd.f32 %v801, %v890
  %v910 = vadd.f32 %v802, %v892
  %v911 = vadd.f32 %v803, %v894
  %v912 = vadd.f32 %v804, %v896
  %v913 = vadd.f32 %v805, %v898
  %v914 = vadd.f32 %v806, %v900
  %v915 = vadd.f32 %v807, %v902
  %v916 = vadd.f32 %v808, %v904
  %917 = vst.msk [vmem:[%s4] sm:$0xff] %vm748, %v905
  %918 = vst.msk [vmem:[%s4 + $0x8] sm:$0xff] %vm748, %v906
  %919 = vst.msk [vmem:[%s4 + $0x10] sm:$0xff] %vm748, %v907
  %920 = vst.msk [vmem:[%s4 + $0x18] sm:$0xff] %vm748, %v908
  %921 = vst.msk [vmem:[%s4 + $0x20] sm:$0xff] %vm748, %v909
  %922 = vst.msk [vmem:[%s4 + $0x28] sm:$0xff] %vm748, %v910
  %923 = vst.msk [vmem:[%s4 + $0x30] sm:$0xff] %vm748, %v911
  %924 = vst.msk [vmem:[%s4 + $0x38] sm:$0xff] %vm748, %v912
  %925 = vst.msk [vmem:[%s4 + $0x40] sm:$0xff] %vm748, %v913
  %926 = vst.msk [vmem:[%s4 + $0x48] sm:$0xff] %vm748, %v914
  %927 = vst.msk [vmem:[%s4 + $0x50] sm:$0xff] %vm748, %v915
  %928 = vst.msk [vmem:[%s4 + $0x58] sm:$0xff] %vm748, %v916
  // Predicated region
  $region14: #{tpu_custom_call.1} parent=0 // pred_check
    _
  $region15: #{tpu_custom_call.1} parent=0 // pred_check_branch
    %930 = sbr.rel (0) target = $region17
  $region16: #{tpu_custom_call.1} parent=0 // pred_region
    _
  $region17: #{tpu_custom_call.1} parent=0 // pred_fallthru
    _
  // Predicated region
  $region18: #{tpu_custom_call.1} parent=0 // pred_check
    _
  $region19: #{tpu_custom_call.1} parent=0 // pred_check_branch
    %932 = sbr.rel (0) target = $region21
  $region20: #{tpu_custom_call.1} parent=0 // pred_region
    _
  $region21: #{tpu_custom_call.1} parent=0 // pred_fallthru
    _
  // Predicated region
  $region22: #{tpu_custom_call.1} parent=0 // pred_check
    _
  $region23: #{tpu_custom_call.1} parent=0 // pred_check_branch
    %934 = sbr.rel (0) target = $region25
  $region24: #{tpu_custom_call.1} parent=0 // pred_region
    _
  $region25: #{tpu_custom_call.1} parent=0 // pred_fallthru
    _
  // Predicated region
  $region26: #{tpu_custom_call.1} parent=0 // pred_check
    _
  $region27: #{tpu_custom_call.1} parent=0 // pred_check_branch
    %936 = sbr.rel (0) target = $region29
  $region28: #{tpu_custom_call.1} parent=0 // pred_region
    _
  $region29: #{tpu_custom_call.1} parent=0 // pred_fallthru
    _

</llo_original>
